<compile_context>
chip_gen: v6e
topology: v6e:2x2x1
jax: 0.10.0
libtpu: 0.0.40
codegen_flags: <defaults>
</compile_context>

<pallas_src>
import functools

import jax
import jax.numpy as jnp
from jax.experimental import pallas as pl
from jax.experimental.pallas import tpu as pltpu


def _round_up(x: int, m: int) -> int:
    return ((x + m - 1) // m) * m


# -----------------------------------------------------------------------------
# Kernel
# -----------------------------------------------------------------------------
def _make_critic_kernel(state_dim: int, action_dim: int, h2: int):
    """Build the fused twin-head kernel for static (state_dim, action_dim, 2*FC).

    Packed-slab row layout (width = h2 = 2*FC_SIZE), all segment starts 8-aligned:
        [0       , in_pad       ) : W_a = [W1 | W4]   (rows 0..in_dim live, rest 0)
        [in_pad  , in_pad +   h2) : W_b = block_diag(W2, W5)
        [.. +h2  , in_pad + 2*h2) : W_c (q1 -> col 0, q2 -> col 1, rest 0)
        [.. 2*h2 , .. 2*h2 + 8  ) : bias block: row0 = b_a, row1 = b_b, row2 = b_c
    """
    in_dim = state_dim + action_dim
    in_pad = _round_up(in_dim, 8)
    r_wb = in_pad
    r_wc = r_wb + h2
    r_b = r_wc + h2

    def kernel(x_ref, u_ref, p_ref, q1_ref, q2_ref):
        x = x_ref[...]                              # (tile_b, state_dim)
        u = u_ref[...]                              # (tile_b, action_dim)

        wa_x = p_ref[0:state_dim, :]                # (S, h2)
        wa_u = p_ref[state_dim:in_dim, :]           # (A, h2)
        wb = p_ref[r_wb:r_wb + h2, :]               # (h2, h2)
        wc = p_ref[r_wc:r_wc + h2, :]               # (h2, h2) (cols 0/1 live)
        ba = p_ref[r_b:r_b + 1, :]                  # (1, h2)
        bb = p_ref[r_b + 1:r_b + 2, :]              # (1, h2)
        bc = p_ref[r_b + 2:r_b + 3, :]              # (1, h2) (cols 0/1 live)

        # Fused twin-head MLP: 3 logical layers, no concatenate needed.
        h = (jnp.dot(x, wa_x, preferred_element_type=jnp.float32)
             + jnp.dot(u, wa_u, preferred_element_type=jnp.float32) + ba)
        h = jnp.maximum(h, 0.0)
        h = jnp.dot(h, wb, preferred_element_type=jnp.float32) + bb
        h = jnp.maximum(h, 0.0)
        q = jnp.dot(h, wc, preferred_element_type=jnp.float32) + bc  # (tile_b, h2)

        q1_ref[...] = q[:, 0:1]
        q2_ref[...] = q[:, 1:2]

    return kernel


# -----------------------------------------------------------------------------
# Wrapper
# -----------------------------------------------------------------------------
def _batch_tile(batch: int) -> int:
    """Largest convenient row tile that divides the batch (multiple of 8 when
    possible); small batches use a single block."""
    if batch <= 512:
        return batch
    for t in (512, 256, 128, 64, 32, 16, 8):
        if batch % t == 0:
            return t
    return batch


@jax.jit
def critic_forward(x, u, packed_params):
    """Returns (q1, q2), each (B, 1) float32 — same semantics as Critic.forward."""
    batch, state_dim = x.shape
    action_dim = u.shape[1]
    h2 = packed_params.shape[1]                    # 2 * FC_SIZE

    tile_b = _batch_tile(batch)
    grid = (pl.cdiv(batch, tile_b),)
    vmem = pltpu.MemorySpace.VMEM

    q1, q2 = pl.pallas_call(
        _make_critic_kernel(state_dim, action_dim, h2),
        out_shape=(
            jax.ShapeDtypeStruct((batch, 1), jnp.float32),
            jax.ShapeDtypeStruct((batch, 1), jnp.float32),
        ),
        grid=grid,
        in_specs=[
            # Activations: tiled over the batch axis.
            pl.BlockSpec((tile_b, state_dim), lambda i: (i, 0), memory_space=vmem),
            pl.BlockSpec((tile_b, action_dim), lambda i: (i, 0), memory_space=vmem),
            # Packed parameter slab: one block, resident in VMEM across the grid.
            pl.BlockSpec(packed_params.shape, lambda i: (0, 0), memory_space=vmem),
        ],
        out_specs=(
            pl.BlockSpec((tile_b, 1), lambda i: (i, 0), memory_space=vmem),
            pl.BlockSpec((tile_b, 1), lambda i: (i, 0), memory_space=vmem),
        ),
        compiler_params=pltpu.CompilerParams(
            dimension_semantics=("parallel",),     # shard batch across TCs on v7x
        ),
    )(x, u, packed_params)

    return q1, q2


# -----------------------------------------------------------------------------
# Parameter construction / packing
# -----------------------------------------------------------------------------
def init_critic_params(key, ekf_state_dim, action_dim, fc_size, std=0.1):
    """Matches init_weights: W ~ N(0, 0.1), b = 0.  Weights stored (in, out)."""
    in_dim = ekf_state_dim + action_dim
    shapes = [
        (in_dim, fc_size), (fc_size,),   # l1
        (fc_size, fc_size), (fc_size,),  # l2
        (fc_size, 1), (1,),              # l3
        (in_dim, fc_size), (fc_size,),   # l4
        (fc_size, fc_size), (fc_size,),  # l5
        (fc_size, 1), (1,),              # l6
    ]
    params = []
    for shp in shapes:
        if len(shp) == 2:   # weight
            key, sub = jax.random.split(key)
            params.append(std * jax.random.normal(sub, shp, dtype=jnp.float32))
        else:               # bias -> kept 2D (1, out)
            params.append(jnp.zeros((1, shp[0]), dtype=jnp.float32))
    return params


def pack_critic_params(w1, b1, w2, b2, w3, b3, w4, b4, w5, b5, w6, b6):
    """Pack the 12 parameter tensors into a single f32 slab (see kernel docstring)."""
    in_dim, fc = w1.shape
    h2 = 2 * fc
    in_pad = _round_up(in_dim, 8)

    wa = jnp.zeros((in_pad, h2), jnp.float32)
    wa = wa.at[:in_dim, :fc].set(w1).at[:in_dim, fc:].set(w4)    # [W1 | W4]

    wb = jnp.zeros((h2, h2), jnp.float32)
    wb = wb.at[:fc, :fc].set(w2).at[fc:, fc:].set(w5)            # block_diag(W2, W5)

    wc = jnp.zeros((h2, h2), jnp.float32)
    wc = wc.at[:fc, 0:1].set(w3).at[fc:, 1:2].set(w6)            # q1 -> col0, q2 -> col1

    bias = jnp.zeros((8, h2), jnp.float32)
    bias = bias.at[0:1, :fc].set(b1).at[0:1, fc:].set(b4)        # b_a
    bias = bias.at[1:2, :fc].set(b2).at[1:2, fc:].set(b5)        # b_b
    bias = bias.at[2:3, 0:1].set(b3).at[2:3, 1:2].set(b6)        # b_c

    return jnp.concatenate([wa, wb, wc, bias], axis=0)           # (in_pad + 2*h2 + 8, h2)


# -----------------------------------------------------------------------------
# Pure-JAX reference (unfused, original twin-head formulation)
# -----------------------------------------------------------------------------
def critic_ref(xu, params):
    (w1, b1, w2, b2, w3, b3, w4, b4, w5, b5, w6, b6) = params

    def head(wa, ba, wb, bb, wc, bc):
        h = jnp.maximum(xu @ wa + ba, 0.0)
        h = jnp.maximum(h @ wb + bb, 0.0)
        return h @ wc + bc

    return head(w1, b1, w2, b2, w3, b3), head(w4, b4, w5, b5, w6, b6)


# -----------------------------------------------------------------------------
# Demo / correctness check
# -----------------------------------------------------------------------------
if __name__ == "__main__":
    EKF_STATE_DIM = 8
    ACTION_DIM = 4
    FC_SIZE = 32
    B = 8

    key = jax.random.PRNGKey(0)
    kx, ku, kp = jax.random.split(key, 3)
    x = jax.random.normal(kx, (B, EKF_STATE_DIM), dtype=jnp.float32)
    u = jax.random.normal(ku, (B, ACTION_DIM), dtype=jnp.float32)

    params = init_critic_params(kp, EKF_STATE_DIM, ACTION_DIM, FC_SIZE)
    packed = pack_critic_params(*params)   # host-side, one-time packing

    q1, q2 = critic_forward(x, u, packed)
    q1 = jax.block_until_ready(q1)
    q2 = jax.block_until_ready(q2)

    xu = jnp.concatenate([x, u], axis=-1)
    q1_ref, q2_ref = critic_ref(xu, params)

    assert q1.shape == (B, 1) and q2.shape == (B, 1)
    assert jnp.allclose(q1, q1_ref, atol=1e-5, rtol=1e-5)
    assert jnp.allclose(q2, q2_ref, atol=1e-5, rtol=1e-5)

    print("KERNEL_OK")
</pallas_src>

<mosaic_0001>
module attributes {stable_mosaic.version = 11 : i64} {
  func.func @kernel(%arg0: i32, %arg1: memref<8x8xf32, #tpu.memory_space<vmem>>, %arg2: memref<8x4xf32, #tpu.memory_space<vmem>>, %arg3: memref<152x64xf32, #tpu.memory_space<vmem>>, %arg4: memref<8x1xf32, #tpu.memory_space<vmem>>, %arg5: memref<8x1xf32, #tpu.memory_space<vmem>>) attributes {dimension_semantics = [#tpu.dimension_semantics<parallel>], iteration_bounds = array<i64: 1>, scalar_prefetch = 0 : i64, scratch_operands = 0 : i64, tpu.core_type = #tpu.core_type<tc>, window_params = [{transform_indices = @transform_0, window_bounds = array<i64: 8, 8>}, {transform_indices = @transform_1, window_bounds = array<i64: 8, 4>}, {pipeline_mode = #tpu.pipeline_mode<synchronous>, transform_indices = @transform_2, window_bounds = array<i64: 152, 64>}, {transform_indices = @transform_3, window_bounds = array<i64: 8, 1>}, {transform_indices = @transform_4, window_bounds = array<i64: 8, 1>}]} {
    %c0 = arith.constant 0 : index
    %c0_0 = arith.constant 0 : index
    %0 = vector.load %arg1[%c0, %c0_0] : memref<8x8xf32, #tpu.memory_space<vmem>>, vector<8x8xf32>
    %c0_1 = arith.constant 0 : index
    %c0_2 = arith.constant 0 : index
    %1 = vector.load %arg2[%c0_1, %c0_2] : memref<8x4xf32, #tpu.memory_space<vmem>>, vector<8x4xf32>
    %c0_3 = arith.constant 0 : index
    %c0_4 = arith.constant 0 : index
    %2 = vector.load %arg3[%c0_3, %c0_4] : memref<152x64xf32, #tpu.memory_space<vmem>>, vector<8x64xf32>
    %c8 = arith.constant 8 : index
    %c0_5 = arith.constant 0 : index
    %3 = vector.load %arg3[%c8, %c0_5] : memref<152x64xf32, #tpu.memory_space<vmem>>, vector<4x64xf32>
    %c16 = arith.constant 16 : index
    %c0_6 = arith.constant 0 : index
    %4 = vector.load %arg3[%c16, %c0_6] : memref<152x64xf32, #tpu.memory_space<vmem>>, vector<64x64xf32>
    %c80 = arith.constant 80 : index
    %c0_7 = arith.constant 0 : index
    %5 = vector.load %arg3[%c80, %c0_7] : memref<152x64xf32, #tpu.memory_space<vmem>>, vector<64x64xf32>
    %c144 = arith.constant 144 : index
    %c0_8 = arith.constant 0 : index
    %6 = vector.load %arg3[%c144, %c0_8] : memref<152x64xf32, #tpu.memory_space<vmem>>, vector<1x64xf32>
    %c145 = arith.constant 145 : index
    %c0_9 = arith.constant 0 : index
    %7 = vector.load %arg3[%c145, %c0_9] : memref<152x64xf32, #tpu.memory_space<vmem>>, vector<1x64xf32>
    %c146 = arith.constant 146 : index
    %c0_10 = arith.constant 0 : index
    %8 = vector.load %arg3[%c146, %c0_10] : memref<152x64xf32, #tpu.memory_space<vmem>>, vector<1x64xf32>
    %cst = arith.constant dense<0.000000e+00> : vector<8x64xf32>
    %9 = tpu.matmul %0, %2, %cst {dimension_numbers = #tpu.dot_dimension_numbers<[1], [0], [0], [1], [0, 0, 1, 1], [], []>} : vector<8x8xf32>, vector<8x64xf32>, vector<8x64xf32> -> vector<8x64xf32>
    %cst_11 = arith.constant dense<0.000000e+00> : vector<8x64xf32>
    %10 = tpu.matmul %1, %3, %cst_11 {dimension_numbers = #tpu.dot_dimension_numbers<[1], [0], [0], [1], [0, 0, 1, 1], [], []>} : vector<8x4xf32>, vector<4x64xf32>, vector<8x64xf32> -> vector<8x64xf32>
    %11 = arith.addf %9, %10 : vector<8x64xf32>
    %12 = vector.broadcast %6 : vector<1x64xf32> to vector<8x64xf32>
    %13 = arith.addf %11, %12 : vector<8x64xf32>
    %cst_12 = arith.constant 0.000000e+00 : f32
    %14 = vector.broadcast %cst_12 : f32 to vector<8x64xf32>
    %15 = arith.maximumf %13, %14 : vector<8x64xf32>
    %cst_13 = arith.constant dense<0.000000e+00> : vector<8x64xf32>
    %16 = tpu.matmul %15, %4, %cst_13 {dimension_numbers = #tpu.dot_dimension_numbers<[1], [0], [0], [1], [0, 0, 1, 1], [], []>} : vector<8x64xf32>, vector<64x64xf32>, vector<8x64xf32> -> vector<8x64xf32>
    %17 = vector.broadcast %7 : vector<1x64xf32> to vector<8x64xf32>
    %18 = arith.addf %16, %17 : vector<8x64xf32>
    %cst_14 = arith.constant 0.000000e+00 : f32
    %19 = vector.broadcast %cst_14 : f32 to vector<8x64xf32>
    %20 = arith.maximumf %18, %19 : vector<8x64xf32>
    %cst_15 = arith.constant dense<0.000000e+00> : vector<8x64xf32>
    %21 = tpu.matmul %20, %5, %cst_15 {dimension_numbers = #tpu.dot_dimension_numbers<[1], [0], [0], [1], [0, 0, 1, 1], [], []>} : vector<8x64xf32>, vector<64x64xf32>, vector<8x64xf32> -> vector<8x64xf32>
    %22 = vector.broadcast %8 : vector<1x64xf32> to vector<8x64xf32>
    %23 = arith.addf %21, %22 : vector<8x64xf32>
    %24 = vector.extract_strided_slice %23 {offsets = [0, 0], sizes = [8, 1], strides = [1, 1]} : vector<8x64xf32> to vector<8x1xf32>
    %c0_16 = arith.constant 0 : index
    %c0_17 = arith.constant 0 : index
    %25 = vector.load %arg4[%c0_16, %c0_17] : memref<8x1xf32, #tpu.memory_space<vmem>>, vector<8x1xf32>
    tpu.vector_store %arg4[%c0_16, %c0_17], %24 {strides = array<i32>} : memref<8x1xf32, #tpu.memory_space<vmem>>, vector<8x1xf32>,
    %26 = vector.extract_strided_slice %23 {offsets = [0, 1], sizes = [8, 1], strides = [1, 1]} : vector<8x64xf32> to vector<8x1xf32>
    %c0_18 = arith.constant 0 : index
    %c0_19 = arith.constant 0 : index
    %27 = vector.load %arg5[%c0_18, %c0_19] : memref<8x1xf32, #tpu.memory_space<vmem>>, vector<8x1xf32>
    tpu.vector_store %arg5[%c0_18, %c0_19], %26 {strides = array<i32>} : memref<8x1xf32, #tpu.memory_space<vmem>>, vector<8x1xf32>,
    return
  }
  func.func @transform_0(%arg0: i32) -> (i32, i32) {
    %c0_i32 = arith.constant 0 : i32
    %c0_i32_0 = arith.constant 0 : i32
    return %arg0, %c0_i32 : i32, i32
  }
  func.func @transform_1(%arg0: i32) -> (i32, i32) {
    %c0_i32 = arith.constant 0 : i32
    %c0_i32_0 = arith.constant 0 : i32
    return %arg0, %c0_i32 : i32, i32
  }
  func.func @transform_2(%arg0: i32) -> (i32, i32) {
    %c0_i32 = arith.constant 0 : i32
    %c0_i32_0 = arith.constant 0 : i32
    %c0_i32_1 = arith.constant 0 : i32
    return %c0_i32, %c0_i32_0 : i32, i32
  }
  func.func @transform_3(%arg0: i32) -> (i32, i32) {
    %c0_i32 = arith.constant 0 : i32
    %c0_i32_0 = arith.constant 0 : i32
    return %arg0, %c0_i32 : i32, i32
  }
  func.func @transform_4(%arg0: i32) -> (i32, i32) {
    %c0_i32 = arith.constant 0 : i32
    %c0_i32_0 = arith.constant 0 : i32
    return %arg0, %c0_i32 : i32, i32
  }
}

</mosaic_0001>

<llo_original>
// kernel: critic_forward.1
$region0: #{critic_forward.1}
  #allocation0 [shape = 'u32[]', space=smem, size = 0x4, offset = 0x4, fixed_abs, tag = 'smem constant byte address 0x4 - core index']
  #allocation1 [shape = 'u32[144,128]{1,0:T(1,128)}', space=vmem, size = 0x12000, scoped, tag = 'internal scratch']
  %s0 = inlined_call_operand.vmem [shape: f32[8,8], index: 0, kind: input, shape index: {}]
  %s1 = inlined_call_operand.vmem [shape: f32[8,4], index: 1, kind: input, shape index: {}]
  %s2 = inlined_call_operand.vmem [shape: f32[152,64], index: 2, kind: input, shape index: {}]
  %s3 = inlined_call_operand.vmem [shape: f32[8,1], index: 3, kind: output, shape index: {0}]
  %s4 = inlined_call_operand.vmem [shape: f32[8,1], index: 4, kind: output, shape index: {1}]
  %5 = xla_tuple %s3, %s4
  %s6 = sld [smem:[#allocation0]]
  $region30: #{critic_forward.1} parent=0
    _
  %s8 = ssub.s32 1, %s6
  %s9 = scalar_select 0, %s8, %s6
  // Predicated region
  $region2: #{critic_forward.1} parent=0 // pred_check
    _
  $region3: #{critic_forward.1} parent=0 // pred_check_branch
    %11 = sbr.rel (0) target = $region5
  $region4: #{critic_forward.1} parent=0 // pred_region
    _
  $region5: #{critic_forward.1} parent=0 // pred_fallthru
    _
  // Predicated region
  $region6: #{critic_forward.1} parent=0 // pred_check
    _
  $region7: #{critic_forward.1} parent=0 // pred_check_branch
    %13 = sbr.rel (0) target = $region9
  $region8: #{critic_forward.1} parent=0 // pred_region
    _
  $region9: #{critic_forward.1} parent=0 // pred_fallthru
    _
  // Predicated region
  $region10: #{critic_forward.1} parent=0 // pred_check
    _
  $region11: #{critic_forward.1} parent=0 // pred_check_branch
    %15 = sbr.rel (0) target = $region13
  $region12: #{critic_forward.1} parent=0 // pred_region
    _
  $region13: #{critic_forward.1} parent=0 // pred_fallthru
    _
  %v16 = vld [vmem:[%s0] sm:$0xff]
  %v17 = vld [vmem:[%s1] sm:$0xff]
  %v18 = vld [vmem:[%s2] sm:$0xff]
  %v19 = vld [vmem:[%s2 + $0x8] sm:$0xf]
  %v20 = vld [vmem:[%s2 + $0x10] sm:$0xff]
  %v21 = vld [vmem:[%s2 + $0x18] sm:$0xff]
  %v22 = vld [vmem:[%s2 + $0x20] sm:$0xff]
  %v23 = vld [vmem:[%s2 + $0x28] sm:$0xff]
  %v24 = vld [vmem:[%s2 + $0x30] sm:$0xff]
  %v25 = vld [vmem:[%s2 + $0x38] sm:$0xff]
  %v26 = vld [vmem:[%s2 + $0x40] sm:$0xff]
  %v27 = vld [vmem:[%s2 + $0x48] sm:$0xff]
  %v28 = vld [vmem:[%s2 + $0x50] sm:$0xff]
  %v29 = vld [vmem:[%s2 + $0x58] sm:$0xff]
  %v30 = vld [vmem:[%s2 + $0x60] sm:$0xff]
  %v31 = vld [vmem:[%s2 + $0x68] sm:$0xff]
  %v32 = vld [vmem:[%s2 + $0x70] sm:$0xff]
  %v33 = vld [vmem:[%s2 + $0x78] sm:$0xff]
  %v34 = vld [vmem:[%s2 + $0x80] sm:$0xff]
  %v35 = vld [vmem:[%s2 + $0x88] sm:$0xff]
  %v36 = vld [vmem:[%s2 + $0x90] sm:$0x1]
  %v37 = vld [vmem:[%s2 + $0x91] sm:$0x1]
  %v38 = vld [vmem:[%s2 + $0x92] sm:$0x1]
  %vm39 = vcmask 31744
  %v41 = vsel %vm39, %v17, 0
  %vm43 = vcmask 1043456
  %v45 = vsel %vm43, %v19, 0
  %47 = vmatprep.subr.mxu0 0.0
  %48 = vmatpush1.msra.mxu0 0.0
  %49 = vmatprep.subr.mxu0 0.0
  %50 = vmatpush1.msra.mxu0 0.0
  %51 = vmatprep.subr.mxu0 0.0
  %52 = vmatpush1.msra.mxu0 0.0
  %53 = vmatprep.subr.mxu0 0.0
  %54 = vmatpush1.msra.mxu0 0.0
  %55 = vmatprep.subr.mxu0 0.0
  %56 = vmatpush1.msra.mxu0 0.0
  %57 = vmatprep.subr.mxu0 0.0
  %58 = vmatpush1.msra.mxu0 0.0
  %59 = vmatprep.subr.mxu0 0.0
  %60 = vmatpush1.msra.mxu0 0.0
  %61 = vmatprep.subr.mxu0 0.0
  %62 = vmatpush1.msra.mxu0 0.0
  %63 = vmatprep.subr.mxu0 0.0
  %64 = vmatpush1.msra.mxu0 0.0
  %65 = vmatprep.subr.mxu0 0.0
  %66 = vmatpush1.msra.mxu0 0.0
  %67 = vmatprep.subr.mxu0 0.0
  %68 = vmatpush1.msra.mxu0 0.0
  %69 = vmatprep.subr.mxu0 0.0
  %70 = vmatpush1.msra.mxu0 0.0
  %71 = vmatprep.subr.mxu0 0.0
  %72 = vmatpush1.msra.mxu0 0.0
  %73 = vmatprep.subr.mxu0 0.0
  %74 = vmatpush1.msra.mxu0 0.0
  %75 = vmatprep.subr.mxu0 0.0
  %76 = vmatpush1.msra.mxu0 0.0
  %77 = vmatprep.subr.mxu0 0.0
  %78 = vmatpush1.msra.mxu0 %v45
  %79 = vmatprep.subr.mxu0 0.0
  %80 = vmatpush2.msra.mxu0 0.0
  %81 = vmatprep.subr.mxu0 0.0
  %82 = vmatpush2.msra.mxu0 0.0
  %83 = vmatprep.subr.mxu0 0.0
  %84 = vmatpush2.msra.mxu0 0.0
  %85 = vmatprep.subr.mxu0 0.0
  %86 = vmatpush2.msra.mxu0 0.0
  %87 = vmatprep.subr.mxu0 0.0
  %88 = vmatpush2.msra.mxu0 0.0
  %89 = vmatprep.subr.mxu0 0.0
  %90 = vmatpush2.msra.mxu0 0.0
  %91 = vmatprep.subr.mxu0 0.0
  %92 = vmatpush2.msra.mxu0 0.0
  %93 = vmatprep.subr.mxu0 0.0
  %94 = vmatpush2.msra.mxu0 0.0
  %95 = vmatprep.subr.mxu0 0.0
  %96 = vmatpush2.msra.mxu0 0.0
  %97 = vmatprep.subr.mxu0 0.0
  %98 = vmatpush2.msra.mxu0 0.0
  %99 = vmatprep.subr.mxu0 0.0
  %100 = vmatpush2.msra.mxu0 0.0
  %101 = vmatprep.subr.mxu0 0.0
  %102 = vmatpush2.msra.mxu0 0.0
  %103 = vmatprep.subr.mxu0 0.0
  %104 = vmatpush2.msra.mxu0 0.0
  %105 = vmatprep.subr.mxu0 0.0
  %106 = vmatpush2.msra.mxu0 0.0
  %107 = vmatprep.subr.mxu0 0.0
  %108 = vmatpush2.msra.mxu0 0.0
  %109 = vmatprep.subr.mxu0 0.0
  %110 = vmatpush2.msra.mxu0 0.0
  %111 = vmatprep.mubr.f32.mxu0 0.0
  %112 = vmatmul.mubr.f32.gmra.mxu0 %v41
  %v113 = vpop.f32.mrf.mxu0
  %v114 = vadd.f32 0.0, %v113
  %v115 = vpop.f32.mrf.mxu0
  %116 = vdwg.mxu0
  %vm117 = vcmask 64512
  %v119 = vsel %vm117, %v16, 0
  %121 = vmatprep.subr.mxu0 0.0
  %122 = vmatpush1.msra.mxu0 0.0
  %123 = vmatprep.subr.mxu0 0.0
  %124 = vmatpush1.msra.mxu0 0.0
  %125 = vmatprep.subr.mxu0 0.0
  %126 = vmatpush1.msra.mxu0 0.0
  %127 = vmatprep.subr.mxu0 0.0
  %128 = vmatpush1.msra.mxu0 0.0
  %129 = vmatprep.subr.mxu0 0.0
  %130 = vmatpush1.msra.mxu0 0.0
  %131 = vmatprep.subr.mxu0 0.0
  %132 = vmatpush1.msra.mxu0 0.0
  %133 = vmatprep.subr.mxu0 0.0
  %134 = vmatpush1.msra.mxu0 0.0
  %135 = vmatprep.subr.mxu0 0.0
  %136 = vmatpush1.msra.mxu0 0.0
  %137 = vmatprep.subr.mxu0 0.0
  %138 = vmatpush1.msra.mxu0 0.0
  %139 = vmatprep.subr.mxu0 0.0
  %140 = vmatpush1.msra.mxu0 0.0
  %141 = vmatprep.subr.mxu0 0.0
  %142 = vmatpush1.msra.mxu0 0.0
  %143 = vmatprep.subr.mxu0 0.0
  %144 = vmatpush1.msra.mxu0 0.0
  %145 = vmatprep.subr.mxu0 0.0
  %146 = vmatpush1.msra.mxu0 0.0
  %147 = vmatprep.subr.mxu0 0.0
  %148 = vmatpush1.msra.mxu0 0.0
  %149 = vmatprep.subr.mxu0 0.0
  %150 = vmatpush1.msra.mxu0 0.0
  %151 = vmatprep.subr.mxu0 0.0
  %152 = vmatpush1.msra.mxu0 %v18
  %153 = vmatprep.subr.mxu0 0.0
  %154 = vmatpush2.msra.mxu0 0.0
  %155 = vmatprep.subr.mxu0 0.0
  %156 = vmatpush2.msra.mxu0 0.0
  %157 = vmatprep.subr.mxu0 0.0
  %158 = vmatpush2.msra.mxu0 0.0
  %159 = vmatprep.subr.mxu0 0.0
  %160 = vmatpush2.msra.mxu0 0.0
  %161 = vmatprep.subr.mxu0 0.0
  %162 = vmatpush2.msra.mxu0 0.0
  %163 = vmatprep.subr.mxu0 0.0
  %164 = vmatpush2.msra.mxu0 0.0
  %165 = vmatprep.subr.mxu0 0.0
  %166 = vmatpush2.msra.mxu0 0.0
  %167 = vmatprep.subr.mxu0 0.0
  %168 = vmatpush2.msra.mxu0 0.0
  %169 = vmatprep.subr.mxu0 0.0
  %170 = vmatpush2.msra.mxu0 0.0
  %171 = vmatprep.subr.mxu0 0.0
  %172 = vmatpush2.msra.mxu0 0.0
  %173 = vmatprep.subr.mxu0 0.0
  %174 = vmatpush2.msra.mxu0 0.0
  %175 = vmatprep.subr.mxu0 0.0
  %176 = vmatpush2.msra.mxu0 0.0
  %177 = vmatprep.subr.mxu0 0.0
  %178 = vmatpush2.msra.mxu0 0.0
  %179 = vmatprep.subr.mxu0 0.0
  %180 = vmatpush2.msra.mxu0 0.0
  %181 = vmatprep.subr.mxu0 0.0
  %182 = vmatpush2.msra.mxu0 0.0
  %183 = vmatprep.subr.mxu0 0.0
  %184 = vmatpush2.msra.mxu0 0.0
  %185 = vmatprep.mubr.f32.mxu0 0.0
  %186 = vmatmul.mubr.f32.gmra.mxu0 %v119
  %v187 = vpop.f32.mrf.mxu0
  %v188 = vadd.f32 %v114, %v187
  %v189 = vpop.f32.mrf.mxu0
  %190 = vdwg.mxu0
  %v191 = vlaneseq
  %v192 = vshrl.u32 %v191, 7
  %v193 = vsub.s32 0, %v192
  %v194 = vrot.slane %v36, %v193
  %v195 = vadd.f32 %v188, %v194
  %v196 = vmax.f32 %v195, 0.0
  %v197 = vlaneseq
  %v198 = vshrl.u32 %v197, 7
  %v199 = vsub.s32 0, %v198
  %v200 = vrot.slane %v37, %v199
  %vm201 = vcmask 523264
  %v203 = vsel %vm201, %v196, 0
  %205 = vmatprep.subr.mxu0 0.0
  %206 = vmatpush1.msra.mxu0 0.0
  %207 = vmatprep.subr.mxu0 0.0
  %208 = vmatpush1.msra.mxu0 0.0
  %209 = vmatprep.subr.mxu0 0.0
  %210 = vmatpush1.msra.mxu0 0.0
  %211 = vmatprep.subr.mxu0 0.0
  %212 = vmatpush1.msra.mxu0 0.0
  %213 = vmatprep.subr.mxu0 0.0
  %214 = vmatpush1.msra.mxu0 0.0
  %215 = vmatprep.subr.mxu0 0.0
  %216 = vmatpush1.msra.mxu0 0.0
  %217 = vmatprep.subr.mxu0 0.0
  %218 = vmatpush1.msra.mxu0 0.0
  %219 = vmatprep.subr.mxu0 0.0
  %220 = vmatpush1.msra.mxu0 0.0
  %221 = vmatprep.subr.mxu0 0.0
  %222 = vmatpush1.msra.mxu0 %v27
  %223 = vmatprep.subr.mxu0 0.0
  %224 = vmatpush1.msra.mxu0 %v26
  %225 = vmatprep.subr.mxu0 0.0
  %226 = vmatpush1.msra.mxu0 %v25
  %227 = vmatprep.subr.mxu0 0.0
  %228 = vmatpush1.msra.mxu0 %v24
  %229 = vmatprep.subr.mxu0 0.0
  %230 = vmatpush1.msra.mxu0 %v23
  %231 = vmatprep.subr.mxu0 0.0
  %232 = vmatpush1.msra.mxu0 %v22
  %233 = vmatprep.subr.mxu0 0.0
  %234 = vmatpush1.msra.mxu0 %v21
  %235 = vmatprep.subr.mxu0 0.0
  %236 = vmatpush1.msra.mxu0 %v20
  %237 = vmatprep.subr.mxu0 0.0
  %238 = vmatpush2.msra.mxu0 0.0
  %239 = vmatprep.subr.mxu0 0.0
  %240 = vmatpush2.msra.mxu0 0.0
  %241 = vmatprep.subr.mxu0 0.0
  %242 = vmatpush2.msra.mxu0 0.0
  %243 = vmatprep.subr.mxu0 0.0
  %244 = vmatpush2.msra.mxu0 0.0
  %245 = vmatprep.subr.mxu0 0.0
  %246 = vmatpush2.msra.mxu0 0.0
  %247 = vmatprep.subr.mxu0 0.0
  %248 = vmatpush2.msra.mxu0 0.0
  %249 = vmatprep.subr.mxu0 0.0
  %250 = vmatpush2.msra.mxu0 0.0
  %251 = vmatprep.subr.mxu0 0.0
  %252 = vmatpush2.msra.mxu0 0.0
  %253 = vmatprep.subr.mxu0 0.0
  %254 = vmatpush2.msra.mxu0 0.0
  %255 = vmatprep.subr.mxu0 0.0
  %256 = vmatpush2.msra.mxu0 0.0
  %257 = vmatprep.subr.mxu0 0.0
  %258 = vmatpush2.msra.mxu0 0.0
  %259 = vmatprep.subr.mxu0 0.0
  %260 = vmatpush2.msra.mxu0 0.0
  %261 = vmatprep.subr.mxu0 0.0
  %262 = vmatpush2.msra.mxu0 0.0
  %263 = vmatprep.subr.mxu0 0.0
  %264 = vmatpush2.msra.mxu0 0.0
  %265 = vmatprep.subr.mxu0 0.0
  %266 = vmatpush2.msra.mxu0 0.0
  %267 = vmatprep.subr.mxu0 0.0
  %268 = vmatpush2.msra.mxu0 0.0
  %269 = vmatprep.mubr.f32.mxu0 0.0
  %270 = vmatmul.mubr.f32.gmra.mxu0 %v203
  %v271 = vpop.f32.mrf.mxu0
  %v272 = vadd.f32 %v200, %v271
  %v273 = vpop.f32.mrf.mxu0
  %274 = vdwg.mxu0
  %v275 = vmax.f32 %v272, 0.0
  %v276 = vlaneseq
  %v277 = vshrl.u32 %v276, 7
  %v278 = vsub.s32 0, %v277
  %v279 = vrot.slane %v38, %v278
  %v281 = vsel %vm201, %v275, 0
  %283 = vmatprep.subr.mxu0 0.0
  %284 = vmatpush1.msra.mxu0 0.0
  %285 = vmatprep.subr.mxu0 0.0
  %286 = vmatpush1.msra.mxu0 0.0
  %287 = vmatprep.subr.mxu0 0.0
  %288 = vmatpush1.msra.mxu0 0.0
  %289 = vmatprep.subr.mxu0 0.0
  %290 = vmatpush1.msra.mxu0 0.0
  %291 = vmatprep.subr.mxu0 0.0
  %292 = vmatpush1.msra.mxu0 0.0
  %293 = vmatprep.subr.mxu0 0.0
  %294 = vmatpush1.msra.mxu0 0.0
  %295 = vmatprep.subr.mxu0 0.0
  %296 = vmatpush1.msra.mxu0 0.0
  %297 = vmatprep.subr.mxu0 0.0
  %298 = vmatpush1.msra.mxu0 0.0
  %299 = vmatprep.subr.mxu0 0.0
  %300 = vmatpush1.msra.mxu0 %v35
  %301 = vmatprep.subr.mxu0 0.0
  %302 = vmatpush1.msra.mxu0 %v34
  %303 = vmatprep.subr.mxu0 0.0
  %304 = vmatpush1.msra.mxu0 %v33
  %305 = vmatprep.subr.mxu0 0.0
  %306 = vmatpush1.msra.mxu0 %v32
  %307 = vmatprep.subr.mxu0 0.0
  %308 = vmatpush1.msra.mxu0 %v31
  %309 = vmatprep.subr.mxu0 0.0
  %310 = vmatpush1.msra.mxu0 %v30
  %311 = vmatprep.subr.mxu0 0.0
  %312 = vmatpush1.msra.mxu0 %v29
  %313 = vmatprep.subr.mxu0 0.0
  %314 = vmatpush1.msra.mxu0 %v28
  %315 = vmatprep.subr.mxu0 0.0
  %316 = vmatpush2.msra.mxu0 0.0
  %317 = vmatprep.subr.mxu0 0.0
  %318 = vmatpush2.msra.mxu0 0.0
  %319 = vmatprep.subr.mxu0 0.0
  %320 = vmatpush2.msra.mxu0 0.0
  %321 = vmatprep.subr.mxu0 0.0
  %322 = vmatpush2.msra.mxu0 0.0
  %323 = vmatprep.subr.mxu0 0.0
  %324 = vmatpush2.msra.mxu0 0.0
  %325 = vmatprep.subr.mxu0 0.0
  %326 = vmatpush2.msra.mxu0 0.0
  %327 = vmatprep.subr.mxu0 0.0
  %328 = vmatpush2.msra.mxu0 0.0
  %329 = vmatprep.subr.mxu0 0.0
  %330 = vmatpush2.msra.mxu0 0.0
  %331 = vmatprep.subr.mxu0 0.0
  %332 = vmatpush2.msra.mxu0 0.0
  %333 = vmatprep.subr.mxu0 0.0
  %334 = vmatpush2.msra.mxu0 0.0
  %335 = vmatprep.subr.mxu0 0.0
  %336 = vmatpush2.msra.mxu0 0.0
  %337 = vmatprep.subr.mxu0 0.0
  %338 = vmatpush2.msra.mxu0 0.0
  %339 = vmatprep.subr.mxu0 0.0
  %340 = vmatpush2.msra.mxu0 0.0
  %341 = vmatprep.subr.mxu0 0.0
  %342 = vmatpush2.msra.mxu0 0.0
  %343 = vmatprep.subr.mxu0 0.0
  %344 = vmatpush2.msra.mxu0 0.0
  %345 = vmatprep.subr.mxu0 0.0
  %346 = vmatpush2.msra.mxu0 0.0
  %347 = vmatprep.mubr.f32.mxu0 0.0
  %348 = vmatmul.mubr.f32.gmra.mxu0 %v281
  %v349 = vpop.f32.mrf.mxu0
  %v350 = vadd.f32 %v279, %v349
  %v351 = vpop.f32.mrf.mxu0
  %352 = vdwg.mxu0
  %vm353 = vcmask 7168
  %354 = vst.msk [vmem:[%s3] sm:$0xff] %vm353, %v350
  %356 = vrot.lane.b32.xlu0 %v350, 127
  %v357 = vpop.permute.xlu0 %356
  %359 = vst.msk [vmem:[%s4] sm:$0xff] %vm353, %v357
  // Predicated region
  $region14: #{critic_forward.1} parent=0 // pred_check
    _
  $region15: #{critic_forward.1} parent=0 // pred_check_branch
    %361 = sbr.rel (0) target = $region17
  $region16: #{critic_forward.1} parent=0 // pred_region
    _
  $region17: #{critic_forward.1} parent=0 // pred_fallthru
    _
  // Predicated region
  $region18: #{critic_forward.1} parent=0 // pred_check
    _
  $region19: #{critic_forward.1} parent=0 // pred_check_branch
    %363 = sbr.rel (0) target = $region21
  $region20: #{critic_forward.1} parent=0 // pred_region
    _
  $region21: #{critic_forward.1} parent=0 // pred_fallthru
    _
  // Predicated region
  $region22: #{critic_forward.1} parent=0 // pred_check
    _
  $region23: #{critic_forward.1} parent=0 // pred_check_branch
    %365 = sbr.rel (0) target = $region25
  $region24: #{critic_forward.1} parent=0 // pred_region
    _
  $region25: #{critic_forward.1} parent=0 // pred_fallthru
    _
  // Predicated region
  $region26: #{critic_forward.1} parent=0 // pred_check
    _
  $region27: #{critic_forward.1} parent=0 // pred_check_branch
    %367 = sbr.rel (0) target = $region29
  $region28: #{critic_forward.1} parent=0 // pred_region
    _
  $region29: #{critic_forward.1} parent=0 // pred_fallthru
    _

</llo_original>
